<compile_context>
chip_gen: v7x
topology: tpu7x:2x2x1
jax: 0.10.0
libtpu: 0.0.40
codegen_flags: <defaults>
</compile_context>

<pallas_src>
import jax
import jax.numpy as jnp
from jax import lax
from jax.experimental import pallas as pl
from jax.experimental.pallas import tpu as pltpu

EPS_IN = 1e-5  # nn.InstanceNorm2d default eps


# ----------------------------------------------------------------------------
# VMEM budgeting (generation aware).
# ----------------------------------------------------------------------------
def _vmem_budget_and_limit():
    """Return (per-step streamed-footprint budget, scoped vmem_limit_bytes)."""
    phys = 64 << 20  # conservative fallback = v7x per-core VMEM
    try:
        phys = int(pltpu.get_tpu_info().vmem_capacity_bytes)
    except Exception:
        pass
    # Budget covers double-buffered in+out streams plus f32 temporaries,
    # with ample headroom (>=4x) below physical VMEM.
    budget = max(4 << 20, min(phys // 4, 32 << 20))
    limit = int(min(phys * 3 // 4, 100 << 20))
    return budget, limit


def _choose_batch_block(B, C, HW_pad, stream_itemsize, budget_bytes):
    """Pick batch block bb and padded batch B_pad (B_pad % bb == 0)."""
    # Per-sample footprint: 2x double-buffered (in + out) streamed blocks
    # plus ~2 full-size f32 temporaries inside the kernel.
    per_sample = C * HW_pad * (4 * stream_itemsize + 8)
    bb = max(1, int(budget_bytes // max(per_sample, 1)))
    if B >= 2:
        bb = min(bb, -(-B // 2))  # >= 2 grid steps -> both v7x TCs get work
    bb = max(1, min(bb, B))
    B_pad = -(-B // bb) * bb
    return bb, B_pad


# ----------------------------------------------------------------------------
# Kernel 1: InstanceNorm stats + SE gate + fused FMA recomposition.
# One batch block per grid step; spatial axis (padded to 128-multiple) on lanes.
# ----------------------------------------------------------------------------
def _make_snr_kernel(inv_hw):
    def kernel(f_ref, w1t_ref, b1_ref, w2t_ref, b2_ref, fp_ref, pools_ref):
        f = f_ref[...].astype(jnp.float32)                     # (bb, C, HWp)

        # InstanceNorm2d statistics (no affine). Padded lanes are zero, so
        # sums are exact with inv_hw = 1/true_HW.
        mu = jnp.sum(f, axis=2, keepdims=True) * inv_hw        # (bb, C, 1)
        ex2 = jnp.sum(f * f, axis=2, keepdims=True) * inv_hw   # (bb, C, 1)
        var = jnp.maximum(ex2 - mu * mu, 0.0)
        s = lax.rsqrt(var + EPS_IN)                            # (bb, C, 1)

        # SE gate.  pool(R) = pool(f) - pool(f_in) = mu (pool(f_in) == 0).
        pr = mu[:, :, 0]                                       # (bb, C)
        h = jnp.maximum(
            jnp.dot(pr, w1t_ref[...], preferred_element_type=jnp.float32)
            + b1_ref[...], 0.0)                                # (bb, CH)
        ak = jax.nn.sigmoid(
            jnp.dot(h, w2t_ref[...], preferred_element_type=jnp.float32)
            + b2_ref[...])                                     # (bb, C)

        # F_p = ak*f + (1-ak)*f_in = f*alpha + gamma  (single FMA per element)
        one_m_ak = 1.0 - ak
        gate = one_m_ak[:, :, None] * s                        # (bb, C, 1)
        alpha = ak[:, :, None] + gate
        gamma = -(mu * gate)
        fp_ref[...] = (f * alpha + gamma).astype(fp_ref.dtype)

        # Pooled outputs from the algebraic identities (no spatial reductions):
        #   pool(F_p) = ak*mu,  pool(F_n) = (1-ak)*mu.
        pools_ref[:, 0:1, :] = (ak * pr)[:, None, :]
        pools_ref[:, 1:2, :] = (one_m_ak * pr)[:, None, :]
    return kernel


def snr_core(f_flat, w1, b1, w2, b2, stream_dtype=None):
    """f_flat: (B, C, HW). Returns F_p (B,C,HW), f_p (B,C), f_n (B,C)."""
    B, C, HW = f_flat.shape
    CH = w1.shape[0]

    if stream_dtype is not None and f_flat.dtype != stream_dtype:
        f_flat = f_flat.astype(stream_dtype)   # bf16 streaming; math stays f32
    out_dtype = f_flat.dtype

    # Lane-dense spatial axis.
    HW_pad = -(-HW // 128) * 128

    budget, vmem_limit = _vmem_budget_and_limit()
    itemsize = jnp.dtype(out_dtype).itemsize
    bb, B_pad = _choose_batch_block(B, C, HW_pad, itemsize, budget)

    if (B_pad != B) or (HW_pad != HW):
        f_flat = jnp.pad(f_flat, ((0, B_pad - B), (0, 0), (0, HW_pad - HW)))

    # Pre-transpose weights so the in-kernel MLP is two plain MXU matmuls.
    w1t = jnp.asarray(w1, jnp.float32).T                       # (C, CH)
    w2t = jnp.asarray(w2, jnp.float32).T                       # (CH, C)
    b1_2d = jnp.asarray(b1, jnp.float32).reshape(1, CH)
    b2_2d = jnp.asarray(b2, jnp.float32).reshape(1, C)

    grid = (B_pad // bb,)
    kernel = _make_snr_kernel(1.0 / float(HW))

    grid_spec = pltpu.PrefetchScalarGridSpec(
        num_scalar_prefetch=0,
        grid=grid,
        in_specs=[
            pl.BlockSpec((bb, C, HW_pad), lambda b: (b, 0, 0)),   # f
            pl.BlockSpec((C, CH), lambda b: (0, 0)),              # w1^T
            pl.BlockSpec((1, CH), lambda b: (0, 0)),              # b1
            pl.BlockSpec((CH, C), lambda b: (0, 0)),              # w2^T
            pl.BlockSpec((1, C), lambda b: (0, 0)),               # b2
        ],
        out_specs=[
            pl.BlockSpec((bb, C, HW_pad), lambda b: (b, 0, 0)),   # F_p
            pl.BlockSpec((bb, 2, C), lambda b: (b, 0, 0)),        # [f_p; f_n]
        ],
    )
    out_shape = (
        jax.ShapeDtypeStruct((B_pad, C, HW_pad), out_dtype),
        jax.ShapeDtypeStruct((B_pad, 2, C), jnp.float32),
    )
    F_p, pools = pl.pallas_call(
        kernel,
        out_shape=out_shape,
        grid_spec=grid_spec,
        compiler_params=pltpu.CompilerParams(
            dimension_semantics=("parallel",),
            vmem_limit_bytes=vmem_limit),
    )(f_flat, w1t, b1_2d, w2t, b2_2d)

    F_p = F_p[:B, :, :HW]
    return F_p, pools[:B, 0, :], pools[:B, 1, :]


# ----------------------------------------------------------------------------
# Kernel 2: pairwise euclidean distances for the two pooled feature sets
# (f_p and f_n), one single-step pallas_call, batched einsum on the MXU.
# dist = sqrt(clamp(xx + yy - 2 * x @ x.T, 1e-12))
# ----------------------------------------------------------------------------
def _dist_pair_kernel(x_ref, o_ref):
    x = x_ref[...]                                             # (2, N, C) f32
    sq = jnp.sum(x * x, axis=2)                                # (2, N)
    gram = jnp.einsum('gnc,gmc->gnm', x, x,
                      preferred_element_type=jnp.float32)      # (2, N, N)
    d = sq[:, :, None] + sq[:, None, :] - 2.0 * gram
    o_ref[...] = jnp.sqrt(jnp.maximum(d, 1e-12))


def compute_dist_pair(x2):
    """x2: (2, N, C) -> (2, N, N) distance matrices in one grid step."""
    G, N, C = x2.shape
    return pl.pallas_call(
        _dist_pair_kernel,
        out_shape=jax.ShapeDtypeStruct((G, N, N), jnp.float32),
    )(x2.astype(jnp.float32))


# ----------------------------------------------------------------------------
# Loss glue (elementwise softplus + masked means) in plain JAX (tiny).
# ----------------------------------------------------------------------------
def compute_loss(dista, distb, labels):
    is_pos = labels[None, :] == labels[:, None]
    is_neg = ~is_pos
    sp = jax.nn.softplus(dista - distb)
    sn = jax.nn.softplus(distb - dista)
    n_pos = jnp.sum(is_pos).astype(jnp.float32)
    n_neg = jnp.sum(is_neg).astype(jnp.float32)
    l_ap = jnp.sum(jnp.where(is_pos, sp, 0.0)) / n_pos
    l_an = jnp.sum(jnp.where(is_neg, sn, 0.0)) / n_neg
    return l_ap + l_an


def snr_forward(x_nchw, labels, params, training=True, stream_dtype=None):
    """x_nchw: (B, C, H, W), labels: (B,) int. Returns (F_x, loss)."""
    w1, b1, w2, b2 = params
    B, C, H, W = x_nchw.shape
    f_flat = x_nchw.reshape(B, C, H * W)
    F_p_flat, f_p, f_n = snr_core(f_flat, w1, b1, w2, b2,
                                  stream_dtype=stream_dtype)
    F_x = F_p_flat.reshape(B, C, H, W)
    if not training:
        return F_x, jnp.float32(0.0)
    # pool(InstanceNorm(x)) == 0, so dist(f_, f_) = sqrt(clamp(0, 1e-12)) = 1e-6
    # everywhere — a constant; no kernel work needed for it.
    dist_const = jnp.full((B, B), 1e-6, dtype=jnp.float32)
    dists = compute_dist_pair(jnp.stack([f_p, f_n], axis=0))   # (2, B, B)
    loss = compute_loss(dists[0], dist_const, labels) + \
           compute_loss(dist_const, dists[1], labels)
    return F_x, loss


# ----------------------------------------------------------------------------
# Pure-JAX reference (faithful to the PyTorch module) for validation.
# ----------------------------------------------------------------------------
def _ref_forward(x, labels, params):
    w1, b1, w2, b2 = params
    mu = x.mean(axis=(2, 3), keepdims=True)
    var = ((x - mu) ** 2).mean(axis=(2, 3), keepdims=True)
    f_in = (x - mu) / jnp.sqrt(var + EPS_IN)
    R = x - f_in
    pr = R.mean(axis=(2, 3))
    h = jnp.maximum(pr @ w1.T + b1, 0.0)
    ak = jax.nn.sigmoid(h @ w2.T + b2)
    ak4 = ak[:, :, None, None]
    F_p = ak4 * R + f_in
    F_n = (1.0 - ak4) * R + f_in
    f_p = F_p.mean(axis=(2, 3))
    f_n = F_n.mean(axis=(2, 3))
    f_ = f_in.mean(axis=(2, 3))

    def dist(v):
        sq = jnp.sum(v * v, axis=1, keepdims=True)
        d = sq + sq.T - 2.0 * v @ v.T
        return jnp.sqrt(jnp.maximum(d, 1e-12))

    loss = compute_loss(dist(f_p), dist(f_), labels) + \
           compute_loss(dist(f_), dist(f_n), labels)
    return F_p, loss


if __name__ == "__main__":
    # Small shapes: C must be >= 16 so that C // 16 >= 1 (Linear hidden dim).
    B, C, H, W = 4, 32, 8, 8
    CH = C // 16

    key = jax.random.PRNGKey(0)
    kx, k1, k2, k3, k4 = jax.random.split(key, 5)
    x = jax.random.normal(kx, (B, C, H, W), dtype=jnp.float32)
    labels = jnp.array([0, 0, 1, 1], dtype=jnp.int32)

    # Deterministic parameter init (Linear weight shapes per PyTorch: (out, in)).
    w1 = 0.2 * jax.random.normal(k1, (CH, C), dtype=jnp.float32)
    b1 = 0.05 * jax.random.normal(k2, (CH,), dtype=jnp.float32)
    w2 = 0.2 * jax.random.normal(k3, (C, CH), dtype=jnp.float32)
    b2 = 0.05 * jax.random.normal(k4, (C,), dtype=jnp.float32)
    params = (w1, b1, w2, b2)

    # f32 streaming path (exact check against the reference).
    F_x, loss = snr_forward(x, labels, params, training=True)
    jax.block_until_ready((F_x, loss))

    F_ref, loss_ref = _ref_forward(x, labels, params)
    assert jnp.allclose(F_x, F_ref, atol=5e-4, rtol=5e-4), "F_x mismatch"
    assert jnp.allclose(loss, loss_ref, atol=2e-3, rtol=2e-3), "loss mismatch"

    # Eval-mode path (no loss).
    F_eval, _ = snr_forward(x, labels, params, training=False)
    jax.block_until_ready(F_eval)
    assert jnp.allclose(F_eval, F_ref, atol=5e-4, rtol=5e-4), "eval F_x mismatch"

    # bf16 streaming path (HBM-bandwidth optimization; looser tolerance).
    F_bf, loss_bf = snr_forward(x, labels, params, training=True,
                                stream_dtype=jnp.bfloat16)
    jax.block_until_ready((F_bf, loss_bf))
    assert jnp.allclose(F_bf.astype(jnp.float32), F_ref,
                        atol=5e-2, rtol=5e-2), "bf16 F_x mismatch"
    assert jnp.allclose(loss_bf, loss_ref, atol=1e-1, rtol=1e-1), \
        "bf16 loss mismatch"

    print("KERNEL_OK")
</pallas_src>

<mosaic_0001>
module attributes {stable_mosaic.version = 11 : i64} {
  func.func @kernel(%arg0: i32, %arg1: memref<2x32x128xf32, #tpu.memory_space<vmem>>, %arg2: memref<32x2xf32, #tpu.memory_space<vmem>>, %arg3: memref<1x2xf32, #tpu.memory_space<vmem>>, %arg4: memref<2x32xf32, #tpu.memory_space<vmem>>, %arg5: memref<1x32xf32, #tpu.memory_space<vmem>>, %arg6: memref<2x32x128xf32, #tpu.memory_space<vmem>>, %arg7: memref<2x2x32xf32, #tpu.memory_space<vmem>>) attributes {dimension_semantics = [#tpu.dimension_semantics<parallel>], iteration_bounds = array<i64: 2>, scalar_prefetch = 0 : i64, scratch_operands = 0 : i64, tpu.core_type = #tpu.core_type<tc>, window_params = [{transform_indices = @transform_0, window_bounds = array<i64: 2, 32, 128>}, {pipeline_mode = #tpu.pipeline_mode<synchronous>, transform_indices = @transform_1, window_bounds = array<i64: 32, 2>}, {pipeline_mode = #tpu.pipeline_mode<synchronous>, transform_indices = @transform_2, window_bounds = array<i64: 1, 2>}, {pipeline_mode = #tpu.pipeline_mode<synchronous>, transform_indices = @transform_3, window_bounds = array<i64: 2, 32>}, {pipeline_mode = #tpu.pipeline_mode<synchronous>, transform_indices = @transform_4, window_bounds = array<i64: 1, 32>}, {transform_indices = @transform_5, window_bounds = array<i64: 2, 32, 128>}, {transform_indices = @transform_6, window_bounds = array<i64: 2, 2, 32>}]} {
    %c0 = arith.constant 0 : index
    %c0_0 = arith.constant 0 : index
    %c0_1 = arith.constant 0 : index
    %0 = vector.load %arg1[%c0, %c0_0, %c0_1] : memref<2x32x128xf32, #tpu.memory_space<vmem>>, vector<2x32x128xf32>
    %cst = arith.constant dense<0.000000e+00> : vector<2x32xf32>
    %1 = vector.multi_reduction <add>, %0, %cst [2] : vector<2x32x128xf32> to vector<2x32xf32>
    %2 = vector.shape_cast %1 : vector<2x32xf32> to vector<2x32x1xf32>
    %cst_2 = arith.constant 1.562500e-02 : f32
    %3 = vector.broadcast %cst_2 : f32 to vector<2x32x1xf32>
    %4 = arith.mulf %2, %3 : vector<2x32x1xf32>
    %5 = arith.mulf %0, %0 : vector<2x32x128xf32>
    %cst_3 = arith.constant dense<0.000000e+00> : vector<2x32xf32>
    %6 = vector.multi_reduction <add>, %5, %cst_3 [2] : vector<2x32x128xf32> to vector<2x32xf32>
    %7 = vector.shape_cast %6 : vector<2x32xf32> to vector<2x32x1xf32>
    %cst_4 = arith.constant 1.562500e-02 : f32
    %8 = vector.broadcast %cst_4 : f32 to vector<2x32x1xf32>
    %9 = arith.mulf %7, %8 : vector<2x32x1xf32>
    %10 = arith.mulf %4, %4 : vector<2x32x1xf32>
    %11 = arith.subf %9, %10 : vector<2x32x1xf32>
    %cst_5 = arith.constant 0.000000e+00 : f32
    %12 = vector.broadcast %cst_5 : f32 to vector<2x32x1xf32>
    %13 = arith.maximumf %11, %12 : vector<2x32x1xf32>
    %cst_6 = arith.constant 9.99999974E-6 : f32
    %14 = vector.broadcast %cst_6 : f32 to vector<2x32x1xf32>
    %15 = arith.addf %13, %14 : vector<2x32x1xf32>
    %16 = math.rsqrt %15 : vector<2x32x1xf32>
    %17 = vector.shape_cast %4 : vector<2x32x1xf32> to vector<2x32xf32>
    %c0_7 = arith.constant 0 : index
    %c0_8 = arith.constant 0 : index
    %18 = vector.load %arg2[%c0_7, %c0_8] : memref<32x2xf32, #tpu.memory_space<vmem>>, vector<32x2xf32>
    %cst_9 = arith.constant dense<0.000000e+00> : vector<2x2xf32>
    %19 = tpu.matmul %17, %18, %cst_9 {dimension_numbers = #tpu.dot_dimension_numbers<[1], [0], [0], [1], [0, 0, 1, 1], [], []>} : vector<2x32xf32>, vector<32x2xf32>, vector<2x2xf32> -> vector<2x2xf32>
    %c0_10 = arith.constant 0 : index
    %c0_11 = arith.constant 0 : index
    %20 = vector.load %arg3[%c0_10, %c0_11] : memref<1x2xf32, #tpu.memory_space<vmem>>, vector<1x2xf32>
    %21 = vector.broadcast %20 : vector<1x2xf32> to vector<2x2xf32>
    %22 = arith.addf %19, %21 : vector<2x2xf32>
    %cst_12 = arith.constant 0.000000e+00 : f32
    %23 = vector.broadcast %cst_12 : f32 to vector<2x2xf32>
    %24 = arith.maximumf %22, %23 : vector<2x2xf32>
    %c0_13 = arith.constant 0 : index
    %c0_14 = arith.constant 0 : index
    %25 = vector.load %arg4[%c0_13, %c0_14] : memref<2x32xf32, #tpu.memory_space<vmem>>, vector<2x32xf32>
    %cst_15 = arith.constant dense<0.000000e+00> : vector<2x32xf32>
    %26 = tpu.matmul %24, %25, %cst_15 {dimension_numbers = #tpu.dot_dimension_numbers<[1], [0], [0], [1], [0, 0, 1, 1], [], []>} : vector<2x2xf32>, vector<2x32xf32>, vector<2x32xf32> -> vector<2x32xf32>
    %c0_16 = arith.constant 0 : index
    %c0_17 = arith.constant 0 : index
    %27 = vector.load %arg5[%c0_16, %c0_17] : memref<1x32xf32, #tpu.memory_space<vmem>>, vector<1x32xf32>
    %28 = vector.broadcast %27 : vector<1x32xf32> to vector<2x32xf32>
    %29 = arith.addf %26, %28 : vector<2x32xf32>
    %30 = arith.negf %29 : vector<2x32xf32>
    %31 = math.exp %30 : vector<2x32xf32>
    %cst_18 = arith.constant 1.000000e+00 : f32
    %32 = vector.broadcast %cst_18 : f32 to vector<2x32xf32>
    %33 = arith.addf %32, %31 : vector<2x32xf32>
    %34 = arith.divf %32, %33 : vector<2x32xf32>
    %cst_19 = arith.constant 1.000000e+00 : f32
    %35 = vector.broadcast %cst_19 : f32 to vector<2x32xf32>
    %36 = arith.subf %35, %34 : vector<2x32xf32>
    %37 = vector.shape_cast %36 : vector<2x32xf32> to vector<2x32x1xf32>
    %38 = arith.mulf %37, %16 : vector<2x32x1xf32>
    %39 = vector.shape_cast %34 : vector<2x32xf32> to vector<2x32x1xf32>
    %40 = arith.addf %39, %38 : vector<2x32x1xf32>
    %41 = arith.mulf %4, %38 : vector<2x32x1xf32>
    %cst_20 = arith.constant 0.000000e+00 : f32
    %42 = vector.broadcast %cst_20 : f32 to vector<2x32x1xf32>
    %43 = arith.subf %42, %41 : vector<2x32x1xf32>
    %44 = vector.broadcast %40 : vector<2x32x1xf32> to vector<2x32x128xf32>
    %45 = arith.mulf %0, %44 : vector<2x32x128xf32>
    %46 = vector.broadcast %43 : vector<2x32x1xf32> to vector<2x32x128xf32>
    %47 = arith.addf %45, %46 : vector<2x32x128xf32>
    %c0_21 = arith.constant 0 : index
    %c0_22 = arith.constant 0 : index
    %c0_23 = arith.constant 0 : index
    %48 = vector.load %arg6[%c0_21, %c0_22, %c0_23] : memref<2x32x128xf32, #tpu.memory_space<vmem>>, vector<2x32x128xf32>
    tpu.vector_store %arg6[%c0_21, %c0_22, %c0_23], %47 {strides = array<i32>} : memref<2x32x128xf32, #tpu.memory_space<vmem>>, vector<2x32x128xf32>,
    %49 = arith.mulf %34, %17 : vector<2x32xf32>
    %50 = vector.shape_cast %49 : vector<2x32xf32> to vector<2x1x32xf32>
    %c0_24 = arith.constant 0 : index
    %c0_25 = arith.constant 0 : index
    %c0_26 = arith.constant 0 : index
    %51 = vector.load %arg7[%c0_24, %c0_25, %c0_26] : memref<2x2x32xf32, #tpu.memory_space<vmem>>, vector<2x1x32xf32>
    tpu.vector_store %arg7[%c0_24, %c0_25, %c0_26], %50 {strides = array<i32>} : memref<2x2x32xf32, #tpu.memory_space<vmem>>, vector<2x1x32xf32>,
    %52 = arith.mulf %36, %17 : vector<2x32xf32>
    %53 = vector.shape_cast %52 : vector<2x32xf32> to vector<2x1x32xf32>
    %c0_27 = arith.constant 0 : index
    %c1 = arith.constant 1 : index
    %c0_28 = arith.constant 0 : index
    %54 = vector.load %arg7[%c0_27, %c1, %c0_28] : memref<2x2x32xf32, #tpu.memory_space<vmem>>, vector<2x1x32xf32>
    tpu.vector_store %arg7[%c0_27, %c1, %c0_28], %53 {strides = array<i32>} : memref<2x2x32xf32, #tpu.memory_space<vmem>>, vector<2x1x32xf32>,
    return
  }
  func.func @transform_0(%arg0: i32) -> (i32, i32, i32) {
    %c0_i32 = arith.constant 0 : i32
    %c0_i32_0 = arith.constant 0 : i32
    %c0_i32_1 = arith.constant 0 : i32
    return %arg0, %c0_i32, %c0_i32_0 : i32, i32, i32
  }
  func.func @transform_1(%arg0: i32) -> (i32, i32) {
    %c0_i32 = arith.constant 0 : i32
    %c0_i32_0 = arith.constant 0 : i32
    %c0_i32_1 = arith.constant 0 : i32
    return %c0_i32, %c0_i32_0 : i32, i32
  }
  func.func @transform_2(%arg0: i32) -> (i32, i32) {
    %c0_i32 = arith.constant 0 : i32
    %c0_i32_0 = arith.constant 0 : i32
    %c0_i32_1 = arith.constant 0 : i32
    return %c0_i32, %c0_i32_0 : i32, i32
  }
  func.func @transform_3(%arg0: i32) -> (i32, i32) {
    %c0_i32 = arith.constant 0 : i32
    %c0_i32_0 = arith.constant 0 : i32
    %c0_i32_1 = arith.constant 0 : i32
    return %c0_i32, %c0_i32_0 : i32, i32
  }
  func.func @transform_4(%arg0: i32) -> (i32, i32) {
    %c0_i32 = arith.constant 0 : i32
    %c0_i32_0 = arith.constant 0 : i32
    %c0_i32_1 = arith.constant 0 : i32
    return %c0_i32, %c0_i32_0 : i32, i32
  }
  func.func @transform_5(%arg0: i32) -> (i32, i32, i32) {
    %c0_i32 = arith.constant 0 : i32
    %c0_i32_0 = arith.constant 0 : i32
    %c0_i32_1 = arith.constant 0 : i32
    return %arg0, %c0_i32, %c0_i32_0 : i32, i32, i32
  }
  func.func @transform_6(%arg0: i32) -> (i32, i32, i32) {
    %c0_i32 = arith.constant 0 : i32
    %c0_i32_0 = arith.constant 0 : i32
    %c0_i32_1 = arith.constant 0 : i32
    return %arg0, %c0_i32, %c0_i32_0 : i32, i32, i32
  }
}

</mosaic_0001>

<llo_original>
// kernel: tpu_custom_call.1
$region0: #{tpu_custom_call.1}
  #allocation0 [shape = 'u32[]', space=smem, size = 0x4, offset = 0x4, fixed_abs, tag = 'smem constant byte address 0x4 - core index']
  #allocation1 [shape = 'u32[144,128]{1,0:T(1,128)}', space=vmem, size = 0x12000, scoped, tag = 'internal scratch']
  %s0 = inlined_call_operand.hbm [shape: f32[4,32,128], index: 0, kind: input, shape index: {}]
  %s1 = inlined_call_operand.vmem [shape: f32[32,2], index: 1, kind: input, shape index: {}]
  %s2 = inlined_call_operand.vmem [shape: f32[1,2], index: 2, kind: input, shape index: {}]
  %s3 = inlined_call_operand.vmem [shape: f32[2,32], index: 3, kind: input, shape index: {}]
  %s4 = inlined_call_operand.vmem [shape: f32[1,32], index: 4, kind: input, shape index: {}]
  %s5 = inlined_call_operand.hbm [shape: f32[4,32,128], index: 5, kind: output, shape index: {0}]
  %s6 = inlined_call_operand.hbm [shape: f32[4,2,32], index: 6, kind: output, shape index: {1}]
  %7 = xla_tuple %s5, %s6
  %s8 = sld [smem:[#allocation0]]
  $region65: #{tpu_custom_call.1} parent=0
    _
  %s10 = ssub.s32 1, %s8
  %s11 = scalar_select 0, %s10, %s8
  $region1: #{tpu_custom_call.1} parent=0
    #allocation2 [shape = 'u8[65536]{0}', space=vmem, size = 0x10000, scoped, tag = 'input window, operand 0']
    #allocation3 [shape = 's32[2]{0}', space=sflag, size = 0x8, scoped, tag = 'scoped memory for tpu_custom_call.1']
    #allocation4 [shape = 's32[2]{0}', space=sflag, size = 0x8, scoped, tag = 'scoped memory for tpu_custom_call.1']
    #allocation5 [shape = 'u8[65536]{0}', space=vmem, size = 0x10000, scoped, tag = 'output window, operand 0']
    #allocation6 [shape = 'u8[4096]{0}', space=vmem, size = 0x1000, scoped, tag = 'output window, operand 1']
    #allocation7 [shape = 's32[2]{0}', space=sflag, size = 0x8, scoped, tag = 'scoped memory for tpu_custom_call.1']
    %12 = vsyncpa [#allocation3], 0
    %s13 = scalar_lea.sflag [#allocation3], 1
    %14 = vsyncpa %s13, 0
    %15 = vsyncpa [#allocation4], 0
    %s16 = scalar_lea.sflag [#allocation4], 1
    %17 = vsyncpa %s16, 0
    %18 = vsyncpa [#allocation7], 0
    %s19 = scalar_lea.sflag [#allocation7], 1
    %20 = vsyncpa %s19, 0
    loop: start=0, step=1, limit=4
    $region2: #{tpu_custom_call.1} parent=1 // loop_pre_header
      _
    $region3: #{tpu_custom_call.1} parent=1 // loop_header
      %s22 = sphi 0, %s26
      %p23 = scmp.ge.s32.totalorder %s22, 4
      %s32 = sphi 0, %s34
      %s35 = sphi 0, %s32
      %s36 = sphi 0, %s35
      %s52 = sphi 0, %s36
      %s56 = sphi 0, %s56
      %s58 = sphi 0, %s56
      %s59 = sphi 0, %s58
      %s73 = sphi 0, %s59
      %s77 = sphi 0, %s77
      %s79 = sphi 0, %s77
      %s80 = sphi 0, %s79
      %s94 = sphi 0, %s80
      %s98 = sphi 0, %s98
      %s100 = sphi 0, %s98
      %s101 = sphi 0, %s100
      %s115 = sphi 0, %s101
      %s119 = sphi 0, %s119
      %s121 = sphi 0, %s119
      %s122 = sphi 0, %s121
      %s136 = sphi 0, %s122
      %s142 = sphi 0, %s144
      %s145 = sphi 0, %s142
      %s146 = sphi 0, %s145
      %s162 = sphi 0, %s146
      %s168 = sphi 0, %s170
      %s171 = sphi 0, %s168
      %s172 = sphi 0, %s171
      %s188 = sphi 0, %s172
    $region4: #{tpu_custom_call.1} parent=1 // loop_header_branch
      %25 = sbr.rel (%p23) target = $region8
    $region5: #{tpu_custom_call.1} parent=1 // loop_body
      %s27 = ssub.s32 %s22, 1
      %s28 = ssub.s32 %s22, 2
      %s29 = sadd.s32 %s22, 1
      %s30 = ssub.s32 %s22, %s29
      %p31 = scmp.eq.s32.totalorder %s30, 0
      %s33 = sadd.s32 %s32, 1
      %s34 = scalar_select %p31, %s32, %s33
      %p37 = pneg %p31
      %p38 = scmp.eq.s32.totalorder %s22, 1
      %p39 = por %p37, %p38
      %p40 = scmp.ne.s32.totalorder %s32, %s35
      %p41 = scmp.eq.s32.totalorder %s22, 0
      %p42 = por %p40, %p41
      %p43 = scmp.ne.s32.totalorder %s32, %s35
      %p44 = scmp.eq.s32.totalorder %s27, 1
      %p45 = por %p43, %p44
      %p46 = scmp.ne.s32.totalorder %s35, %s36
      %p47 = scmp.eq.s32.totalorder %s27, 0
      %p48 = por %p46, %p47
      %p49 = scmp.ne.s32.totalorder %s35, %s36
      %p50 = scmp.eq.s32.totalorder %s28, 1
      %p51 = por %p49, %p50
      %p53 = scmp.ne.s32.totalorder %s36, %s52
      %p54 = scmp.eq.s32.totalorder %s28, 0
      %p55 = por %p53, %p54
      %s57 = sadd.s32 %s56, 1
      %p60 = scmp.eq.s32.totalorder %s22, 1
      %p61 = scmp.ne.s32.totalorder %s56, %s58
      %p62 = scmp.eq.s32.totalorder %s22, 0
      %p63 = por %p61, %p62
      %p64 = scmp.ne.s32.totalorder %s56, %s58
      %p65 = scmp.eq.s32.totalorder %s27, 1
      %p66 = por %p64, %p65
      %p67 = scmp.ne.s32.totalorder %s58, %s59
      %p68 = scmp.eq.s32.totalorder %s27, 0
      %p69 = por %p67, %p68
      %p70 = scmp.ne.s32.totalorder %s58, %s59
      %p71 = scmp.eq.s32.totalorder %s28, 1
      %p72 = por %p70, %p71
      %p74 = scmp.ne.s32.totalorder %s59, %s73
      %p75 = scmp.eq.s32.totalorder %s28, 0
      %p76 = por %p74, %p75
      %s78 = sadd.s32 %s77, 1
      %p81 = scmp.eq.s32.totalorder %s22, 1
      %p82 = scmp.ne.s32.totalorder %s77, %s79
      %p83 = scmp.eq.s32.totalorder %s22, 0
      %p84 = por %p82, %p83
      %p85 = scmp.ne.s32.totalorder %s77, %s79
      %p86 = scmp.eq.s32.totalorder %s27, 1
      %p87 = por %p85, %p86
      %p88 = scmp.ne.s32.totalorder %s79, %s80
      %p89 = scmp.eq.s32.totalorder %s27, 0
      %p90 = por %p88, %p89
      %p91 = scmp.ne.s32.totalorder %s79, %s80
      %p92 = scmp.eq.s32.totalorder %s28, 1
      %p93 = por %p91, %p92
      %p95 = scmp.ne.s32.totalorder %s80, %s94
      %p96 = scmp.eq.s32.totalorder %s28, 0
      %p97 = por %p95, %p96
      %s99 = sadd.s32 %s98, 1
      %p102 = scmp.eq.s32.totalorder %s22, 1
      %p103 = scmp.ne.s32.totalorder %s98, %s100
      %p104 = scmp.eq.s32.totalorder %s22, 0
      %p105 = por %p103, %p104
      %p106 = scmp.ne.s32.totalorder %s98, %s100
      %p107 = scmp.eq.s32.totalorder %s27, 1
      %p108 = por %p106, %p107
      %p109 = scmp.ne.s32.totalorder %s100, %s101
      %p110 = scmp.eq.s32.totalorder %s27, 0
      %p111 = por %p109, %p110
      %p112 = scmp.ne.s32.totalorder %s100, %s101
      %p113 = scmp.eq.s32.totalorder %s28, 1
      %p114 = por %p112, %p113
      %p116 = scmp.ne.s32.totalorder %s101, %s115
      %p117 = scmp.eq.s32.totalorder %s28, 0
      %p118 = por %p116, %p117
      %s120 = sadd.s32 %s119, 1
      %p123 = scmp.eq.s32.totalorder %s22, 1
      %p124 = scmp.ne.s32.totalorder %s119, %s121
      %p125 = scmp.eq.s32.totalorder %s22, 0
      %p126 = por %p124, %p125
      %p127 = scmp.ne.s32.totalorder %s119, %s121
      %p128 = scmp.eq.s32.totalorder %s27, 1
      %p129 = por %p127, %p128
      %p130 = scmp.ne.s32.totalorder %s121, %s122
      %p131 = scmp.eq.s32.totalorder %s27, 0
      %p132 = por %p130, %p131
      %p133 = scmp.ne.s32.totalorder %s121, %s122
      %p134 = scmp.eq.s32.totalorder %s28, 1
      %p135 = por %p133, %p134
      %p137 = scmp.ne.s32.totalorder %s122, %s136
      %p138 = scmp.eq.s32.totalorder %s28, 0
      %p139 = por %p137, %p138
      %s140 = ssub.s32 %s22, %s29
      %p141 = scmp.eq.s32.totalorder %s140, 0
      %s143 = sadd.s32 %s142, 1
      %s144 = scalar_select %p141, %s142, %s143
      %p147 = pneg %p141
      %p148 = scmp.eq.s32.totalorder %s22, 1
      %p149 = por %p147, %p148
      %p150 = scmp.ne.s32.totalorder %s142, %s145
      %p151 = scmp.eq.s32.totalorder %s22, 0
      %p152 = por %p150, %p151
      %p153 = scmp.ne.s32.totalorder %s142, %s145
      %p154 = scmp.eq.s32.totalorder %s27, 1
      %p155 = por %p153, %p154
      %p156 = scmp.ne.s32.totalorder %s145, %s146
      %p157 = scmp.eq.s32.totalorder %s27, 0
      %p158 = por %p156, %p157
      %p159 = scmp.ne.s32.totalorder %s145, %s146
      %p160 = scmp.eq.s32.totalorder %s28, 1
      %p161 = por %p159, %p160
      %p163 = scmp.ne.s32.totalorder %s146, %s162
      %p164 = scmp.eq.s32.totalorder %s28, 0
      %p165 = por %p163, %p164
      %s166 = ssub.s32 %s22, %s29
      %p167 = scmp.eq.s32.totalorder %s166, 0
      %s169 = sadd.s32 %s168, 1
      %s170 = scalar_select %p167, %s168, %s169
      %p173 = pneg %p167
      %p174 = scmp.eq.s32.totalorder %s22, 1
      %p175 = por %p173, %p174
      %p176 = scmp.ne.s32.totalorder %s168, %s171
      %p177 = scmp.eq.s32.totalorder %s22, 0
      %p178 = por %p176, %p177
      %p179 = scmp.ne.s32.totalorder %s168, %s171
      %p180 = scmp.eq.s32.totalorder %s27, 1
      %p181 = por %p179, %p180
      %p182 = scmp.ne.s32.totalorder %s171, %s172
      %p183 = scmp.eq.s32.totalorder %s27, 0
      %p184 = por %p182, %p183
      %p185 = scmp.ne.s32.totalorder %s171, %s172
      %p186 = scmp.eq.s32.totalorder %s28, 1
      %p187 = por %p185, %p186
      %p189 = scmp.ne.s32.totalorder %s172, %s188
      %p190 = scmp.eq.s32.totalorder %s28, 0
      %p191 = por %p189, %p190
      %p192 = scmp.le.s32.totalorder 1, %s22
      %p193 = scmp.lt.s32.totalorder %s22, 3
      %p194 = pnand %p192, %p193
      %p195 = pneg %p194
      // Predicated region
      $region9: #{tpu_custom_call.1} parent=5 // pred_check
        _
      $region10: #{tpu_custom_call.1} parent=5 // pred_check_branch
        %197 = sbr.rel (%p194) target = $region12
      $region11: #{tpu_custom_call.1} parent=5 // pred_region
        %s198 = ssub.s32 %s22, 1
        // Predicated region
        $region13: #{tpu_custom_call.1} parent=11 // pred_check
          %p199 = pneg %p69
        $region14: #{tpu_custom_call.1} parent=11 // pred_check_branch
          %201 = sbr.rel (%p199) target = $region16
        $region15: #{tpu_custom_call.1} parent=11 // pred_region
          _
        $region16: #{tpu_custom_call.1} parent=11 // pred_fallthru
          _
        // Predicated region
        $region17: #{tpu_custom_call.1} parent=11 // pred_check
          %p202 = pneg %p90
        $region18: #{tpu_custom_call.1} parent=11 // pred_check_branch
          %204 = sbr.rel (%p202) target = $region20
        $region19: #{tpu_custom_call.1} parent=11 // pred_region
          _
        $region20: #{tpu_custom_call.1} parent=11 // pred_fallthru
          _
        // Predicated region
        $region21: #{tpu_custom_call.1} parent=11 // pred_check
          %p205 = pneg %p111
        $region22: #{tpu_custom_call.1} parent=11 // pred_check_branch
          %207 = sbr.rel (%p205) target = $region24
        $region23: #{tpu_custom_call.1} parent=11 // pred_region
          _
        $region24: #{tpu_custom_call.1} parent=11 // pred_fallthru
          _
        // Predicated region
        $region25: #{tpu_custom_call.1} parent=11 // pred_check
          %p208 = pneg %p132
        $region26: #{tpu_custom_call.1} parent=11 // pred_check_branch
          %210 = sbr.rel (%p208) target = $region28
        $region27: #{tpu_custom_call.1} parent=11 // pred_region
          _
        $region28: #{tpu_custom_call.1} parent=11 // pred_fallthru
          _
      $region12: #{tpu_custom_call.1} parent=5 // pred_fallthru
        _
      %p211 = scmp.lt.s32.totalorder %s22, 2
      // Predicated region
      $region29: #{tpu_custom_call.1} parent=5 // pred_check
        %p212 = pneg %p211
      $region30: #{tpu_custom_call.1} parent=5 // pred_check_branch
        %214 = sbr.rel (%p212) target = $region32
      $region31: #{tpu_custom_call.1} parent=5 // pred_region
        // Predicated region
        $region33: #{tpu_custom_call.1} parent=31 // pred_check
          %p215 = pneg %p42
        $region34: #{tpu_custom_call.1} parent=31 // pred_check_branch
          %217 = sbr.rel (%p215) target = $region36
        $region35: #{tpu_custom_call.1} parent=31 // pred_region
          %s218 = sand.u32 %s32, 1
          %s219 = scalar_lea.sflag [#allocation3], %s218
          %s220 = sand.u32 %s32, 1
          %s221 = smul.addr %s220, 64
          %s222 = scalar_lea.vmem [#allocation2], %s221
          %s223 = smul.u32 2, %s22
          %s225 = ssub.s32 1024, 1024
          %226 = vsyncadd %s219, %s225
          %s227 = smul.addr %s223, 4
          %s228 = smul.addr %s227, 128
          %s229 = scalar_lea.hbm %s0, %s228
          %s230 = sshll.u32 %s222, 4
          %s231 = int_to_ptr.vmem [resolvable:$true] %s230
          %236 = dma.hbm_to_vmem [thread:$0]  %s229, 1024, %s231, %s219, 128, 128, 8
        $region36: #{tpu_custom_call.1} parent=31 // pred_fallthru
          _
      $region32: #{tpu_custom_call.1} parent=5 // pred_fallthru
        _
      %p237 = scmp.le.s32.totalorder 1, %s22
      %p238 = scmp.lt.s32.totalorder %s22, 3
      %p239 = pnand %p237, %p238
      %p240 = pneg %p239
      // Predicated region
      $region37: #{tpu_custom_call.1} parent=5 // pred_check
        _
      $region38: #{tpu_custom_call.1} parent=5 // pred_check_branch
        %242 = sbr.rel (%p239) target = $region40
      $region39: #{tpu_custom_call.1} parent=5 // pred_region
        %s243 = ssub.s32 %s22, 1
        %s244 = sand.u32 %s35, 1
        %s245 = scalar_lea.sflag [#allocation3], %s244
        %s246 = sand.u32 %s35, 1
        %s247 = smul.addr %s246, 64
        %s248 = scalar_lea.vmem [#allocation2], %s247
        // Predicated region
        $region41: #{tpu_custom_call.1} parent=39 // pred_check
          %p249 = pneg %p48
        $region42: #{tpu_custom_call.1} parent=39 // pred_check_branch
          %251 = sbr.rel (%p249) target = $region44
        $region43: #{tpu_custom_call.1} parent=39 // pred_region
          %252 = dma.done %s245, 1024
        $region44: #{tpu_custom_call.1} parent=39 // pred_fallthru
          _
        %s253 = sand.u32 %s35, 1
        %s254 = scalar_lea.sflag [#allocation3], %s253
        %s255 = sand.u32 %s35, 1
        %s256 = smul.addr %s255, 64
        %s257 = scalar_lea.vmem [#allocation2], %s256
        %p258 = pneg %p48
        %p259 = pneg %p45
        %p260 = pneg %p69
        %p261 = pneg %p66
        %p262 = pneg %p90
        %p263 = pneg %p87
        %p264 = pneg %p111
        %p265 = pneg %p108
        %p266 = pneg %p132
        %p267 = pneg %p129
        %p268 = pneg %p158
        %p269 = pneg %p155
        %s270 = sand.u32 %s145, 1
        %s271 = scalar_lea.sflag [#allocation4], %s270
        %s272 = sand.u32 %s145, 1
        %s273 = smul.addr %s272, 64
        %s274 = scalar_lea.vmem [#allocation5], %s273
        %p275 = pneg %p184
        %p276 = pneg %p181
        %s277 = sand.u32 %s171, 1
        %s278 = scalar_lea.sflag [#allocation7], %s277
        %s279 = sand.u32 %s171, 1
        %s280 = smul.addr %s279, 4
        %s281 = scalar_lea.vmem [#allocation6], %s280
        %s282 = smul.u32 2, %s27
        %s283 = smul.u32 2, %s27
        %s284 = smul.u32 2, %s27
        %v285 = vld [vmem:[%s248] sm:$0xff]
        %v286 = vld [vmem:[%s248 + $0x8] sm:$0xff]
        %v287 = vld [vmem:[%s248 + $0x10] sm:$0xff]
        %v288 = vld [vmem:[%s248 + $0x18] sm:$0xff]
        %v289 = vld [vmem:[%s248 + $0x20] sm:$0xff]
        %v290 = vld [vmem:[%s248 + $0x28] sm:$0xff]
        %v291 = vld [vmem:[%s248 + $0x30] sm:$0xff]
        %v292 = vld [vmem:[%s248 + $0x38] sm:$0xff]
        %293 = vadd.xlane.f32.xlu0 %v285
        %v294 = vpop.xlane.xlu0 %293
        %295 = vadd.xlane.f32.xlu0 %v286
        %v296 = vpop.xlane.xlu0 %295
        %297 = vadd.xlane.f32.xlu0 %v287
        %v298 = vpop.xlane.xlu0 %297
        %299 = vadd.xlane.f32.xlu0 %v288
        %v300 = vpop.xlane.xlu0 %299
        %301 = vadd.xlane.f32.xlu0 %v289
        %v302 = vpop.xlane.xlu0 %301
        %303 = vadd.xlane.f32.xlu0 %v290
        %v304 = vpop.xlane.xlu0 %303
        %305 = vadd.xlane.f32.xlu0 %v291
        %v306 = vpop.xlane.xlu0 %305
        %307 = vadd.xlane.f32.xlu0 %v292
        %v308 = vpop.xlane.xlu0 %307
        %v309 = vmul.f32 %v294, 0.015625
        %v310 = vmul.f32 %v296, 0.015625
        %v311 = vmul.f32 %v298, 0.015625
        %v312 = vmul.f32 %v300, 0.015625
        %v313 = vmul.f32 %v302, 0.015625
        %v314 = vmul.f32 %v304, 0.015625
        %v315 = vmul.f32 %v306, 0.015625
        %v316 = vmul.f32 %v308, 0.015625
        %v317 = vmul.f32 %v285, %v285
        %v318 = vmul.f32 %v286, %v286
        %v319 = vmul.f32 %v287, %v287
        %v320 = vmul.f32 %v288, %v288
        %v321 = vmul.f32 %v289, %v289
        %v322 = vmul.f32 %v290, %v290
        %v323 = vmul.f32 %v291, %v291
        %v324 = vmul.f32 %v292, %v292
        %325 = vadd.xlane.f32.xlu0 %v317
        %v326 = vpop.xlane.xlu0 %325
        %327 = vadd.xlane.f32.xlu0 %v318
        %v328 = vpop.xlane.xlu0 %327
        %329 = vadd.xlane.f32.xlu0 %v319
        %v330 = vpop.xlane.xlu0 %329
        %331 = vadd.xlane.f32.xlu0 %v320
        %v332 = vpop.xlane.xlu0 %331
        %333 = vadd.xlane.f32.xlu0 %v321
        %v334 = vpop.xlane.xlu0 %333
        %335 = vadd.xlane.f32.xlu0 %v322
        %v336 = vpop.xlane.xlu0 %335
        %337 = vadd.xlane.f32.xlu0 %v323
        %v338 = vpop.xlane.xlu0 %337
        %339 = vadd.xlane.f32.xlu0 %v324
        %v340 = vpop.xlane.xlu0 %339
        %v341 = vmul.f32 %v326, 0.015625
        %v342 = vmul.f32 %v328, 0.015625
        %v343 = vmul.f32 %v330, 0.015625
        %v344 = vmul.f32 %v332, 0.015625
        %v345 = vmul.f32 %v334, 0.015625
        %v346 = vmul.f32 %v336, 0.015625
        %v347 = vmul.f32 %v338, 0.015625
        %v348 = vmul.f32 %v340, 0.015625
        %v349 = vmul.f32 %v309, %v309
        %v350 = vmul.f32 %v310, %v310
        %v351 = vmul.f32 %v311, %v311
        %v352 = vmul.f32 %v312, %v312
        %v353 = vmul.f32 %v313, %v313
        %v354 = vmul.f32 %v314, %v314
        %v355 = vmul.f32 %v315, %v315
        %v356 = vmul.f32 %v316, %v316
        %v357 = vsub.f32 %v341, %v349
        %v358 = vsub.f32 %v342, %v350
        %v359 = vsub.f32 %v343, %v351
        %v360 = vsub.f32 %v344, %v352
        %v361 = vsub.f32 %v345, %v353
        %v362 = vsub.f32 %v346, %v354
        %v363 = vsub.f32 %v347, %v355
        %v364 = vsub.f32 %v348, %v356
        %v365 = vmax.f32 %v357, 0.0
        %v366 = vmax.f32 %v358, 0.0
        %v367 = vmax.f32 %v359, 0.0
        %v368 = vmax.f32 %v360, 0.0
        %v369 = vmax.f32 %v361, 0.0
        %v370 = vmax.f32 %v362, 0.0
        %v371 = vmax.f32 %v363, 0.0
        %v372 = vmax.f32 %v364, 0.0
        %v373 = vadd.f32 %v365, 1e-05
        %v374 = vadd.f32 %v366, 1e-05
        %v375 = vadd.f32 %v367, 1e-05
        %v376 = vadd.f32 %v368, 1e-05
        %v377 = vadd.f32 %v369, 1e-05
        %v378 = vadd.f32 %v370, 1e-05
        %v379 = vadd.f32 %v371, 1e-05
        %v380 = vadd.f32 %v372, 1e-05
        %v381 = vrsqrt.pop %v373
        %v382 = vrsqrt.pop %v374
        %v383 = vrsqrt.pop %v375
        %v384 = vrsqrt.pop %v376
        %v385 = vrsqrt.pop %v377
        %v386 = vrsqrt.pop %v378
        %v387 = vrsqrt.pop %v379
        %v388 = vrsqrt.pop %v380
        %v389 = vld [vmem:[%s1] sm:$0xff]
        %v390 = vld [vmem:[%s1 + $0x8] sm:$0xff]
        %v391 = vld [vmem:[%s1 + $0x10] sm:$0xff]
        %v392 = vld [vmem:[%s1 + $0x18] sm:$0xff]
        %v393 = vld [vmem:[%s2] sm:$0x1]
        %v395 = vlaneseq
        %v396 = vshrl.u32 %v395, 7
        %v397 = vsub.s32 0, %v396
        %v398 = vrot.slane %v393, %v397
        %v408 = vlaneseq
        %v409 = vand.u32 %v408, 127
        %v410 = vlaneseq
        %v411 = vshrl.u32 %v410, 7
        %v412 = vsub.s32 %v409, %v411
        %v413 = vrot.slane %v309, %v412
        %v414 = vadd.s32 %v409, 4294967288
        %v415 = vlaneseq
        %v416 = vshrl.u32 %v415, 7
        %v417 = vsub.s32 %v414, %v416
        %v418 = vrot.slane %v310, %v417
        %vm419 = vcmask 130112
        %v420 = vsel %vm419, %v418, %v413
        %v421 = vadd.s32 %v409, 4294967280
        %v422 = vlaneseq
        %v423 = vshrl.u32 %v422, 7
        %v424 = vsub.s32 %v421, %v423
        %v425 = vrot.slane %v311, %v424
        %vm426 = vcmask 195712
        %v427 = vsel %vm426, %v425, %v420
        %v428 = vadd.s32 %v409, 4294967272
        %v429 = vlaneseq
        %v430 = vshrl.u32 %v429, 7
        %v431 = vsub.s32 %v428, %v430
        %v432 = vrot.slane %v312, %v431
        %vm433 = vcmask 261312
        %v434 = vsel %vm433, %v432, %v427
        %v435 = vlaneseq
        %v436 = vshrl.u32 %v435, 7
        %v437 = vsub.s32 %v409, %v436
        %v438 = vrot.slane %v313, %v437
        %v439 = vlaneseq
        %v440 = vshrl.u32 %v439, 7
        %v441 = vsub.s32 %v414, %v440
        %v442 = vrot.slane %v314, %v441
        %v443 = vsel %vm419, %v442, %v438
        %v444 = vlaneseq
        %v445 = vshrl.u32 %v444, 7
        %v446 = vsub.s32 %v421, %v445
        %v447 = vrot.slane %v315, %v446
        %v448 = vsel %vm426, %v447, %v443
        %v449 = vlaneseq
        %v450 = vshrl.u32 %v449, 7
        %v451 = vsub.s32 %v428, %v450
        %v452 = vrot.slane %v316, %v451
        %v453 = vsel %vm433, %v452, %v448
        %vm454 = vcmask 1041409
        %v455 = vsel %vm454, %v453, %v434
        %vm456 = vcmask 261120
        %v457 = vsel %vm456, %v455, 0
        %459 = vmatprep.subr.mxu0 0.0
        %460 = vmatpush1.msra.mxu0 %v389
        %461 = vmatprep.subr.mxu0 0.0
        %462 = vmatpush1.msra.mxu0 %v390
        %463 = vmatprep.subr.mxu0 0.0
        %464 = vmatpush1.msra.mxu0 %v391
        %465 = vmatprep.subr.mxu0 0.0
        %466 = vmatpush1.msra.mxu0 %v392
        %467 = vmatprep.subr.mxu0 0.0
        %468 = vmatpush1.msra.mxu0 0.0
        %469 = vmatprep.subr.mxu0 0.0
        %470 = vmatpush1.msra.mxu0 0.0
        %471 = vmatprep.subr.mxu0 0.0
        %472 = vmatpush1.msra.mxu0 0.0
        %473 = vmatprep.subr.mxu0 0.0
        %474 = vmatpush1.msra.mxu0 0.0
        %475 = vmatprep.subr.mxu0 0.0
        %476 = vmatpush1.msra.mxu0 0.0
        %477 = vmatprep.subr.mxu0 0.0
        %478 = vmatpush1.msra.mxu0 0.0
        %479 = vmatprep.subr.mxu0 0.0
        %480 = vmatpush1.msra.mxu0 0.0
        %481 = vmatprep.subr.mxu0 0.0
        %482 = vmatpush1.msra.mxu0 0.0
        %483 = vmatprep.subr.mxu0 0.0
        %484 = vmatpush1.msra.mxu0 0.0
        %485 = vmatprep.subr.mxu0 0.0
        %486 = vmatpush1.msra.mxu0 0.0
        %487 = vmatprep.subr.mxu0 0.0
        %488 = vmatpush1.msra.mxu0 0.0
        %489 = vmatprep.subr.mxu0 0.0
        %490 = vmatpush1.msra.mxu0 0.0
        %491 = vmatprep.subr.mxu0 0.0
        %492 = vmatpush1.msra.mxu0 0.0
        %493 = vmatprep.subr.mxu0 0.0
        %494 = vmatpush1.msra.mxu0 0.0
        %495 = vmatprep.subr.mxu0 0.0
        %496 = vmatpush1.msra.mxu0 0.0
        %497 = vmatprep.subr.mxu0 0.0
        %498 = vmatpush1.msra.mxu0 0.0
        %499 = vmatprep.subr.mxu0 0.0
        %500 = vmatpush1.msra.mxu0 0.0
        %501 = vmatprep.subr.mxu0 0.0
        %502 = vmatpush1.msra.mxu0 0.0
        %503 = vmatprep.subr.mxu0 0.0
        %504 = vmatpush1.msra.mxu0 0.0
        %505 = vmatprep.subr.mxu0 0.0
        %506 = vmatpush1.msra.mxu0 0.0
        %507 = vmatprep.subr.mxu0 0.0
        %508 = vmatpush1.msra.mxu0 0.0
        %509 = vmatprep.subr.mxu0 0.0
        %510 = vmatpush1.msra.mxu0 0.0
        %511 = vmatprep.subr.mxu0 0.0
        %512 = vmatpush1.msra.mxu0 0.0
        %513 = vmatprep.subr.mxu0 0.0
        %514 = vmatpush1.msra.mxu0 0.0
        %515 = vmatprep.subr.mxu0 0.0
        %516 = vmatpush1.msra.mxu0 0.0
        %517 = vmatprep.subr.mxu0 0.0
        %518 = vmatpush1.msra.mxu0 0.0
        %519 = vmatprep.subr.mxu0 0.0
        %520 = vmatpush1.msra.mxu0 0.0
        %521 = vmatprep.subr.mxu0 0.0
        %522 = vmatpush1.msra.mxu0 0.0
        %523 = vmatprep.mubr.f32.mxu0 0.0
        %524 = vmatmul.mubr.f32.gmra.mrb[0].mxu0 %v457
        %v525 = vpop.f32.mrb[0].mxu0
        %v526 = vadd.f32 %v398, %v525
        %v527 = vpop.f32.mrb[0].mxu0
        %528 = vdwg.mxu0
        %v529 = vmax.f32 %v526, 0.0
        %v530 = vld [vmem:[%s3] sm:$0x3]
        %v531 = vld [vmem:[%s4] sm:$0x1]
        %v533 = vlaneseq
        %v534 = vshrl.u32 %v533, 7
        %v535 = vsub.s32 0, %v534
        %v536 = vrot.slane %v531, %v535
        %vm538 = vcmask 15360
        %v540 = vsel %vm538, %v529, 0
        %vm542 = vcmask 1041408
        %v544 = vsel %vm542, %v530, 0
        %546 = vmatprep.subr.mxu0 0.0
        %547 = vmatpush1.msra.mxu0 %v544
        %548 = vmatprep.subr.mxu0 0.0
        %549 = vmatpush1.msra.mxu0 0.0
        %550 = vmatprep.subr.mxu0 0.0
        %551 = vmatpush1.msra.mxu0 0.0
        %552 = vmatprep.subr.mxu0 0.0
        %553 = vmatpush1.msra.mxu0 0.0
        %554 = vmatprep.subr.mxu0 0.0
        %555 = vmatpush1.msra.mxu0 0.0
        %556 = vmatprep.subr.mxu0 0.0
        %557 = vmatpush1.msra.mxu0 0.0
        %558 = vmatprep.subr.mxu0 0.0
        %559 = vmatpush1.msra.mxu0 0.0
        %560 = vmatprep.subr.mxu0 0.0
        %561 = vmatpush1.msra.mxu0 0.0
        %562 = vmatprep.subr.mxu0 0.0
        %563 = vmatpush1.msra.mxu0 0.0
        %564 = vmatprep.subr.mxu0 0.0
        %565 = vmatpush1.msra.mxu0 0.0
        %566 = vmatprep.subr.mxu0 0.0
        %567 = vmatpush1.msra.mxu0 0.0
        %568 = vmatprep.subr.mxu0 0.0
        %569 = vmatpush1.msra.mxu0 0.0
        %570 = vmatprep.subr.mxu0 0.0
        %571 = vmatpush1.msra.mxu0 0.0
        %572 = vmatprep.subr.mxu0 0.0
        %573 = vmatpush1.msra.mxu0 0.0
        %574 = vmatprep.subr.mxu0 0.0
        %575 = vmatpush1.msra.mxu0 0.0
        %576 = vmatprep.subr.mxu0 0.0
        %577 = vmatpush1.msra.mxu0 0.0
        %578 = vmatprep.subr.mxu0 0.0
        %579 = vmatpush1.msra.mxu0 0.0
        %580 = vmatprep.subr.mxu0 0.0
        %581 = vmatpush1.msra.mxu0 0.0
        %582 = vmatprep.subr.mxu0 0.0
        %583 = vmatpush1.msra.mxu0 0.0
        %584 = vmatprep.subr.mxu0 0.0
        %585 = vmatpush1.msra.mxu0 0.0
        %586 = vmatprep.subr.mxu0 0.0
        %587 = vmatpush1.msra.mxu0 0.0
        %588 = vmatprep.subr.mxu0 0.0
        %589 = vmatpush1.msra.mxu0 0.0
        %590 = vmatprep.subr.mxu0 0.0
        %591 = vmatpush1.msra.mxu0 0.0
        %592 = vmatprep.subr.mxu0 0.0
        %593 = vmatpush1.msra.mxu0 0.0
        %594 = vmatprep.subr.mxu0 0.0
        %595 = vmatpush1.msra.mxu0 0.0
        %596 = vmatprep.subr.mxu0 0.0
        %597 = vmatpush1.msra.mxu0 0.0
        %598 = vmatprep.subr.mxu0 0.0
        %599 = vmatpush1.msra.mxu0 0.0
        %600 = vmatprep.subr.mxu0 0.0
        %601 = vmatpush1.msra.mxu0 0.0
        %602 = vmatprep.subr.mxu0 0.0
        %603 = vmatpush1.msra.mxu0 0.0
        %604 = vmatprep.subr.mxu0 0.0
        %605 = vmatpush1.msra.mxu0 0.0
        %606 = vmatprep.subr.mxu0 0.0
        %607 = vmatpush1.msra.mxu0 0.0
        %608 = vmatprep.subr.mxu0 0.0
        %609 = vmatpush1.msra.mxu0 0.0
        %610 = vmatprep.mubr.f32.mxu0 0.0
        %611 = vmatmul.mubr.f32.gmra.mrb[0].mxu0 %v540
        %v612 = vpop.f32.mrb[0].mxu0
        %v613 = vadd.f32 %v536, %v612
        %v614 = vpop.f32.mrb[0].mxu0
        %615 = vdwg.mxu0
        %v616 = vxor.u32 %v613, 2147483648
        %v617 = vmul.f32 %v616, 1.442695
        %v618 = vpow.pop %v617
        %v619 = vadd.f32 %v618, 1.0
        %v620 = vrcp.pop %v619
        %v621 = vmul.f32 1.0, %v620
        %v622 = vsub.f32 1.0, %v621
        %v623 = vlaneseq
        %v624 = vshrl.u32 %v623, 7
        %v625 = vsub.s32 0, %v624
        %v626 = vrot.slane %v622, %v625
        %628 = vbcast.lane.b32.xlu0 %v626, 256
        %v629 = vpop.permute.xlu0 %628
        %s631 = sor.u32 256, 8
        %632 = vbcast.lane.b32.xlu0 %v626, %s631
        %v633 = vpop.permute.xlu0 %632
        %s635 = sor.u32 256, 16
        %636 = vbcast.lane.b32.xlu0 %v626, %s635
        %v637 = vpop.permute.xlu0 %636
        %s639 = sor.u32 256, 24
        %640 = vbcast.lane.b32.xlu0 %v626, %s639
        %v641 = vpop.permute.xlu0 %640
        %v642 = vlaneseq
        %v643 = vshrl.u32 %v642, 7
        %v644 = vsub.s32 1, %v643
        %v645 = vrot.slane %v622, %v644
        %647 = vbcast.lane.b32.xlu0 %v645, 256
        %v648 = vpop.permute.xlu0 %647
        %s650 = sor.u32 256, 8
        %651 = vbcast.lane.b32.xlu0 %v645, %s650
        %v652 = vpop.permute.xlu0 %651
        %s654 = sor.u32 256, 16
        %655 = vbcast.lane.b32.xlu0 %v645, %s654
        %v656 = vpop.permute.xlu0 %655
        %s658 = sor.u32 256, 24
        %659 = vbcast.lane.b32.xlu0 %v645, %s658
        %v660 = vpop.permute.xlu0 %659
        %v661 = vmul.f32 %v629, %v381
        %v662 = vmul.f32 %v633, %v382
        %v663 = vmul.f32 %v637, %v383
        %v664 = vmul.f32 %v641, %v384
        %v665 = vmul.f32 %v648, %v385
        %v666 = vmul.f32 %v652, %v386
        %v667 = vmul.f32 %v656, %v387
        %v668 = vmul.f32 %v660, %v388
        %v669 = vlaneseq
        %v670 = vshrl.u32 %v669, 7
        %v671 = vsub.s32 0, %v670
        %v672 = vrot.slane %v621, %v671
        %674 = vbcast.lane.b32.xlu0 %v672, 256
        %v675 = vpop.permute.xlu0 %674
        %s677 = sor.u32 256, 8
        %678 = vbcast.lane.b32.xlu0 %v672, %s677
        %v679 = vpop.permute.xlu0 %678
        %s681 = sor.u32 256, 16
        %682 = vbcast.lane.b32.xlu0 %v672, %s681
        %v683 = vpop.permute.xlu0 %682
        %s685 = sor.u32 256, 24
        %686 = vbcast.lane.b32.xlu0 %v672, %s685
        %v687 = vpop.permute.xlu0 %686
        %v688 = vlaneseq
        %v689 = vshrl.u32 %v688, 7
        %v690 = vsub.s32 1, %v689
        %v691 = vrot.slane %v621, %v690
        %693 = vbcast.lane.b32.xlu0 %v691, 256
        %v694 = vpop.permute.xlu0 %693
        %s696 = sor.u32 256, 8
        %697 = vbcast.lane.b32.xlu0 %v691, %s696
        %v698 = vpop.permute.xlu0 %697
        %s700 = sor.u32 256, 16
        %701 = vbcast.lane.b32.xlu0 %v691, %s700
        %v702 = vpop.permute.xlu0 %701
        %s704 = sor.u32 256, 24
        %705 = vbcast.lane.b32.xlu0 %v691, %s704
        %v706 = vpop.permute.xlu0 %705
        %v707 = vadd.f32 %v675, %v661
        %v708 = vadd.f32 %v679, %v662
        %v709 = vadd.f32 %v683, %v663
        %v710 = vadd.f32 %v687, %v664
        %v711 = vadd.f32 %v694, %v665
        %v712 = vadd.f32 %v698, %v666
        %v713 = vadd.f32 %v702, %v667
        %v714 = vadd.f32 %v706, %v668
        %v715 = vmul.f32 %v309, %v661
        %v716 = vmul.f32 %v310, %v662
        %v717 = vmul.f32 %v311, %v663
        %v718 = vmul.f32 %v312, %v664
        %v719 = vmul.f32 %v313, %v665
        %v720 = vmul.f32 %v314, %v666
        %v721 = vmul.f32 %v315, %v667
        %v722 = vmul.f32 %v316, %v668
        %v723 = vsub.f32 0.0, %v715
        %v724 = vsub.f32 0.0, %v716
        %v725 = vsub.f32 0.0, %v717
        %v726 = vsub.f32 0.0, %v718
        %v727 = vsub.f32 0.0, %v719
        %v728 = vsub.f32 0.0, %v720
        %v729 = vsub.f32 0.0, %v721
        %v730 = vsub.f32 0.0, %v722
        %v731 = vmul.f32 %v285, %v707
        %v732 = vmul.f32 %v286, %v708
        %v733 = vmul.f32 %v287, %v709
        %v734 = vmul.f32 %v288, %v710
        %v735 = vmul.f32 %v289, %v711
        %v736 = vmul.f32 %v290, %v712
        %v737 = vmul.f32 %v291, %v713
        %v738 = vmul.f32 %v292, %v714
        %v739 = vadd.f32 %v731, %v723
        %v740 = vadd.f32 %v732, %v724
        %v741 = vadd.f32 %v733, %v725
        %v742 = vadd.f32 %v734, %v726
        %v743 = vadd.f32 %v735, %v727
        %v744 = vadd.f32 %v736, %v728
        %v745 = vadd.f32 %v737, %v729
        %v746 = vadd.f32 %v738, %v730
        %747 = vst [vmem:[%s274] sm:$0xff] %v739
        %748 = vst [vmem:[%s274 + $0x8] sm:$0xff] %v740
        %749 = vst [vmem:[%s274 + $0x10] sm:$0xff] %v741
        %750 = vst [vmem:[%s274 + $0x18] sm:$0xff] %v742
        %751 = vst [vmem:[%s274 + $0x20] sm:$0xff] %v743
        %752 = vst [vmem:[%s274 + $0x28] sm:$0xff] %v744
        %753 = vst [vmem:[%s274 + $0x30] sm:$0xff] %v745
        %754 = vst [vmem:[%s274 + $0x38] sm:$0xff] %v746
        %v756 = vmul.f32 %v621, %v455
        %v759 = vunpack.c.l.s4 1966171168
        %v760 = vunpack.c.0.s8 %v759
        %v761 = vlaneseq
        %v762 = vshrl.u32 %v761, 7
        %v763 = vsub.s32 %v760, %v762
        %v764 = vrot.slane %v756, %v763
        %v765 = vcombine.high %v764, %v764
        %v767 = vunpack.c.l.s4 1966171168
        %v768 = vunpack.c.0.s8 %v767
        %v769 = vlaneseq
        %v770 = vshrl.u32 %v769, 7
        %v771 = vsub.s32 %v768, %v770
        %v772 = vrot.slane %v764, %v771
        %v774 = vunpack.c.l.s4 1966171168
        %v775 = vunpack.c.0.s8 %v774
        %v776 = vlaneseq
        %v777 = vshrl.u32 %v776, 7
        %v778 = vsub.s32 %v775, %v777
        %v779 = vrot.slane %v765, %v778
        %vm782 = vcmask 253952
        %783 = vst.msk [vmem:[%s281] sm:$0x1] %vm782, %v772
        %784 = vst.msk [vmem:[%s281 + $0x2] sm:$0x1] %vm782, %v779
        %v785 = vmul.f32 %v622, %v455
        %v788 = vunpack.c.l.s4 1966171168
        %v789 = vunpack.c.0.s8 %v788
        %v790 = vlaneseq
        %v791 = vshrl.u32 %v790, 7
        %v792 = vsub.s32 %v789, %v791
        %v793 = vrot.slane %v785, %v792
        %v794 = vcombine.high %v793, %v793
        %v796 = vunpack.c.l.s4 1966171168
        %v797 = vunpack.c.0.s8 %v796
        %v798 = vlaneseq
        %v799 = vshrl.u32 %v798, 7
        %v800 = vsub.s32 %v797, %v799
        %v801 = vrot.slane %v793, %v800
        %v803 = vunpack.c.l.s4 1966171168
        %v804 = vunpack.c.0.s8 %v803
        %v805 = vlaneseq
        %v806 = vshrl.u32 %v805, 7
        %v807 = vsub.s32 %v804, %v806
        %v808 = vrot.slane %v794, %v807
        %811 = vst.msk [vmem:[%s281 + $0x1] sm:$0x1] %vm782, %v801
        %812 = vst.msk [vmem:[%s281 + $0x3] sm:$0x1] %vm782, %v808
        %s813 = sand.u32 %s145, 1
        %s814 = scalar_lea.sflag [#allocation4], %s813
        %s815 = sand.u32 %s145, 1
        %s816 = smul.addr %s815, 64
        %s817 = scalar_lea.vmem [#allocation5], %s816
        %s818 = sand.u32 %s171, 1
        %s819 = scalar_lea.sflag [#allocation7], %s818
        %s820 = sand.u32 %s171, 1
        %s821 = smul.addr %s820, 4
        %s822 = scalar_lea.vmem [#allocation6], %s821
        // Predicated region
        $region45: #{tpu_custom_call.1} parent=39 // pred_check
          %p823 = pneg %p155
        $region46: #{tpu_custom_call.1} parent=39 // pred_check_branch
          %825 = sbr.rel (%p823) target = $region48
        $region47: #{tpu_custom_call.1} parent=39 // pred_region
          %s826 = smul.u32 2, %s27
          %s828 = ssub.s32 1024, 1024
          %829 = vsyncadd %s814, %s828
          %s830 = smul.addr %s826, 4
          %s831 = smul.addr %s830, 128
          %s832 = scalar_lea.hbm %s5, %s831
          %s833 = sshll.u32 %s817, 4
          %s834 = int_to_ptr.vmem [resolvable:$true] %s833
          %839 = dma.vmem_to_hbm [thread:$0]  %s834, 1024, %s832, %s814, 128, 128, 8
        $region48: #{tpu_custom_call.1} parent=39 // pred_fallthru
          _
        // Predicated region
        $region49: #{tpu_custom_call.1} parent=39 // pred_check
          %p840 = pneg %p181
        $region50: #{tpu_custom_call.1} parent=39 // pred_check_branch
          %842 = sbr.rel (%p840) target = $region52
        $region51: #{tpu_custom_call.1} parent=39 // pred_region
          %s843 = smul.u32 2, %s27
          %s845 = ssub.s32 64, 64
          %846 = vsyncadd %s819, %s845
          %s847 = smul.addr %s843, 32
          %s848 = scalar_lea.hbm %s6, %s847
          %s849 = sshll.u32 %s822, 4
          %s850 = int_to_ptr.vmem [resolvable:$true] %s849
          %855 = dma.vmem_to_hbm [thread:$0]  %s850, 64, %s848, %s819, 32, 32, 2
        $region52: #{tpu_custom_call.1} parent=39 // pred_fallthru
          _
      $region40: #{tpu_custom_call.1} parent=5 // pred_fallthru
        _
      %p856 = scmp.le.s32.totalorder 2, %s22
      // Predicated region
      $region53: #{tpu_custom_call.1} parent=5 // pred_check
        %p857 = pneg %p856
      $region54: #{tpu_custom_call.1} parent=5 // pred_check_branch
        %859 = sbr.rel (%p857) target = $region56
      $region55: #{tpu_custom_call.1} parent=5 // pred_region
        %s860 = ssub.s32 %s22, 2
        // Predicated region
        $region57: #{tpu_custom_call.1} parent=55 // pred_check
          %p861 = pneg %p161
        $region58: #{tpu_custom_call.1} parent=55 // pred_check_branch
          %863 = sbr.rel (%p861) target = $region60
        $region59: #{tpu_custom_call.1} parent=55 // pred_region
          %s864 = sand.u32 %s146, 1
          %s865 = scalar_lea.sflag [#allocation4], %s864
          %s866 = sand.u32 %s146, 1
          %s867 = smul.addr %s866, 64
          %s868 = scalar_lea.vmem [#allocation5], %s867
          %869 = dma.done %s865, 1024
        $region60: #{tpu_custom_call.1} parent=55 // pred_fallthru
          _
        // Predicated region
        $region61: #{tpu_custom_call.1} parent=55 // pred_check
          %p870 = pneg %p187
        $region62: #{tpu_custom_call.1} parent=55 // pred_check_branch
          %872 = sbr.rel (%p870) target = $region64
        $region63: #{tpu_custom_call.1} parent=55 // pred_region
          %s873 = sand.u32 %s172, 1
          %s874 = scalar_lea.sflag [#allocation7], %s873
          %s875 = sand.u32 %s172, 1
          %s876 = smul.addr %s875, 4
          %s877 = scalar_lea.vmem [#allocation6], %s876
          %878 = dma.done %s874, 64
        $region64: #{tpu_custom_call.1} parent=55 // pred_fallthru
          _
      $region56: #{tpu_custom_call.1} parent=5 // pred_fallthru
        _
    $region6: #{tpu_custom_call.1} parent=1 // loop_footer
      %s26 = sadd.s32 1, %s22
    $region7: #{tpu_custom_call.1} parent=1 // loop_footer_branch
      %21 = sbr.rel target = $region3
    $region8: #{tpu_custom_call.1} parent=1 // loop_exit
      _
    %879 = vsyncpa [#allocation3], 1
    %s880 = scalar_lea.sflag [#allocation3], 1
    %881 = vsyncpa %s880, 1
    %882 = vsyncpa [#allocation4], 1
    %s883 = scalar_lea.sflag [#allocation4], 1
    %884 = vsyncpa %s883, 1
    %885 = vsyncpa [#allocation7], 1
    %s886 = scalar_lea.sflag [#allocation7], 1
    %887 = vsyncpa %s886, 1

</llo_original>
